<compile_context>
chip_gen: v7x
topology: tpu7x:2x2x1
jax: 0.10.0
libtpu: 0.0.40
codegen_flags: <defaults>
</compile_context>

<pallas_src>
import math
import numpy as np
import jax
import jax.numpy as jnp
from jax.experimental import pallas as pl
from jax.experimental.pallas import tpu as pltpu


# ----------------------------------------------------------------------------
# Deterministic parameter construction (mirrors MotionBlurOperator.__init__)
# ----------------------------------------------------------------------------
def _bresenham_line(x0, y0, x1, y1):
    points = []
    x0, y0, x1, y1 = map(round, [x0, y0, x1, y1])
    dx = abs(x1 - x0)
    dy = abs(y1 - y0)
    sx = 1 if x0 < x1 else -1
    sy = 1 if y0 < y1 else -1
    err = dx - dy
    while True:
        points.append((x0, y0))
        if x0 == x1 and y0 == y1:
            break
        e2 = 2 * err
        if e2 > -dy:
            err -= dy
            x0 += sx
        if e2 < dx:
            err += dx
            y0 += sy
    return points


def generate_motion_kernel(kernel_size=9, angle=0.0, intensity=1.0):
    size = kernel_size
    center = size // 2
    kernel = np.zeros((size, size), dtype=np.float32)
    angle_rad = math.radians(angle)
    cos_a = math.cos(angle_rad)
    sin_a = math.sin(angle_rad)
    length = size // 2
    x0 = center - length * cos_a
    y0 = center - length * sin_a
    x1 = center + length * cos_a
    y1 = center + length * sin_a
    for x, y in _bresenham_line(x0, y0, x1, y1):
        if 0 <= x < size and 0 <= y < size:
            kernel[x, y] = 1.0
    s = kernel.sum()
    if s > 0:
        kernel = kernel * (intensity / s)
    return kernel  # (K, K) == weight[0, 0, :, :] of the torch module


# ----------------------------------------------------------------------------
# Pallas kernel: depthwise "same" conv2d with a fixed (K, K) motion kernel
# ----------------------------------------------------------------------------
def motion_blur_forward(x, kernel_np):
    """x: (N, C, H, W) float32 -> (N, C, H, W) float32."""
    N, C, H, W = x.shape
    weights = np.asarray(kernel_np, dtype=np.float32)
    K = int(weights.shape[0])
    pad = K // 2
    Hp = H + 2 * pad                 # padded rows in scratch
    Wp = W + 2 * pad                 # padded lanes in scratch (logical)
    NC = N * C

    xf = x.reshape(NC, H, W)         # free reshape, no HBM copy, no host pad

    # --- static tap list; motion kernels are sparse and uniform-weighted -----
    taps = [(i, j, float(weights[i, j]))
            for i in range(K) for j in range(K) if weights[i, j] != 0.0]
    if taps:
        tap_ws = np.array([w for _, _, w in taps], dtype=np.float32)
        uniform = bool(np.all(tap_ws == tap_ws[0]))
        w0 = float(tap_ws[0])
    else:
        uniform, w0 = True, 0.0

    # --- generation-aware VMEM sizing -----------------------------------------
    try:
        vmem_cap = int(pltpu.get_tpu_info().vmem_capacity_bytes)
    except Exception:
        vmem_cap = 64 * 1024 * 1024              # conservative (v7x per-TC size)
    vmem_budget = min(vmem_cap // 4, 24 * 1024 * 1024)
    vmem_limit = min(vmem_cap // 2, 32 * 1024 * 1024)

    def _phys(rows, cols):                        # f32 bytes after (8,128) padding
        return (-(-rows // 8) * 8) * (-(-cols // 128) * 128) * 4

    # double-buffered in + out blocks + padded scratch (strip temporaries are
    # register-sized by construction, see strip sizing below)
    per_plane = 2 * _phys(H, W) + 2 * _phys(H, W) + _phys(Hp, Wp)
    P = max(1, min(vmem_budget // per_plane, NC))
    if NC >= 4:
        P = min(P, max(1, NC // 4))   # >= 4 grid steps (>= 2 per TC on v7x)
    elif NC >= 2:
        P = min(P, max(1, NC // 2))
    P = int(P)
    grid_steps = int(pl.cdiv(NC, P))

    # Row-strip height: keep the per-strip accumulator ~<= 16 vregs so all taps
    # are summed in registers and stored exactly once per strip.
    lane_tiles = -(-W // 128)
    S = min(H, 8 * max(1, 16 // max(1, P * lane_tiles)))
    n_strips = -(-H // S)

    def conv_kernel(x_ref, o_ref, pad_ref):
        # (1) Halo-only zeroing, every step (scratch is per-core; never gate on
        #     program_id with a "parallel" grid axis).  Interior is overwritten.
        if pad > 0:
            zr = jnp.zeros((P, pad, Wp), jnp.float32)
            pad_ref[:, 0:pad, :] = zr
            pad_ref[:, pad + H:Hp, :] = zr
            zc = jnp.zeros((P, H, pad), jnp.float32)
            pad_ref[:, pad:pad + H, 0:pad] = zc
            pad_ref[:, pad:pad + H, pad + W:Wp] = zc
        pad_ref[:, pad:pad + H, pad:pad + W] = x_ref[...].astype(jnp.float32)

        # (2) Cross-correlation (F.conv2d semantics):
        #     out[p, y, x] = sum_{i,j} w[i, j] * padded[p, y + i, x + j]
        #     Per row strip: sum all taps in registers, store once.
        for si in range(n_strips):
            r0 = si * S
            rows = min(S, H - r0)
            if not taps:
                o_ref[:, r0:r0 + rows, :] = jnp.zeros((P, rows, W), o_ref.dtype)
                continue
            acc = None
            for (i, j, w) in taps:
                term = pad_ref[:, r0 + i:r0 + i + rows, j:j + W]
                if not uniform:
                    term = term * w              # general fallback only
                acc = term if acc is None else acc + term
            if uniform and w0 != 1.0:
                acc = acc * w0                   # apply uniform weight once
            o_ref[:, r0:r0 + rows, :] = acc.astype(o_ref.dtype)

    n_taps = max(1, len(taps))
    cost = pl.CostEstimate(
        flops=2 * NC * H * W * n_taps,
        transcendentals=0,
        bytes_accessed=2 * NC * H * W * 4,
    )

    out = pl.pallas_call(
        conv_kernel,
        out_shape=jax.ShapeDtypeStruct((NC, H, W), x.dtype),
        grid=(grid_steps,),
        in_specs=[pl.BlockSpec((P, H, W), lambda i: (i, 0, 0))],
        out_specs=pl.BlockSpec((P, H, W), lambda i: (i, 0, 0)),
        scratch_shapes=[pltpu.VMEM((P, Hp, Wp), jnp.float32)],
        compiler_params=pltpu.CompilerParams(
            dimension_semantics=("parallel",),
            vmem_limit_bytes=int(vmem_limit)),
        cost_estimate=cost,
    )(xf)
    return out.reshape(N, C, H, W)


# ----------------------------------------------------------------------------
# Exact host-side reference (same math, no conv-precision ambiguity)
# ----------------------------------------------------------------------------
def motion_blur_reference(x, kernel_np):
    xn = np.asarray(x, dtype=np.float32)
    K = kernel_np.shape[0]
    p = K // 2
    _, _, H, W = xn.shape
    xp = np.pad(xn, ((0, 0), (0, 0), (p, p), (p, p)))
    out = np.zeros_like(xn)
    for i in range(K):
        for j in range(K):
            w = float(kernel_np[i, j])
            if w != 0.0:
                out += w * xp[:, :, i:i + H, j:j + W]
    return out


if __name__ == "__main__":
    # angle=30 exercises multiple kernel rows AND columns (row + column shifts)
    kernel_size, angle, intensity = 9, 30.0, 1.0
    kern = generate_motion_kernel(kernel_size, angle, intensity)

    key = jax.random.PRNGKey(0)
    x = jax.random.normal(key, (2, 4, 16, 16), dtype=jnp.float32)

    out = jax.block_until_ready(motion_blur_forward(x, kern))
    ref = motion_blur_reference(x, kern)
    np.testing.assert_allclose(np.asarray(out), ref, rtol=1e-5, atol=1e-5)

    print("KERNEL_OK")
</pallas_src>

<mosaic_0001>
module attributes {stable_mosaic.version = 11 : i64} {
  func.func @conv_kernel(%arg0: i32, %arg1: memref<2x16x16xf32, #tpu.memory_space<vmem>>, %arg2: memref<2x16x16xf32, #tpu.memory_space<vmem>>, %arg3: memref<2x24x24xf32, #tpu.memory_space<vmem>>) attributes {dimension_semantics = [#tpu.dimension_semantics<parallel>], iteration_bounds = array<i64: 4>, scalar_prefetch = 0 : i64, scratch_operands = 1 : i64, tpu.core_type = #tpu.core_type<tc>, window_params = [{transform_indices = @transform_0, window_bounds = array<i64: 2, 16, 16>}, {transform_indices = @transform_1, window_bounds = array<i64: 2, 16, 16>}]} {
    %cst = arith.constant 0.000000e+00 : f32
    %0 = vector.broadcast %cst : f32 to vector<2x4x24xf32>
    %c0 = arith.constant 0 : index
    %c0_0 = arith.constant 0 : index
    %c0_1 = arith.constant 0 : index
    %1 = vector.load %arg3[%c0, %c0_0, %c0_1] : memref<2x24x24xf32, #tpu.memory_space<vmem>>, vector<2x4x24xf32>
    tpu.vector_store %arg3[%c0, %c0_0, %c0_1], %0 {strides = array<i32>} : memref<2x24x24xf32, #tpu.memory_space<vmem>>, vector<2x4x24xf32>,
    %c0_2 = arith.constant 0 : index
    %c20 = arith.constant 20 : index
    %c0_3 = arith.constant 0 : index
    %2 = vector.load %arg3[%c0_2, %c20, %c0_3] : memref<2x24x24xf32, #tpu.memory_space<vmem>>, vector<2x4x24xf32>
    tpu.vector_store %arg3[%c0_2, %c20, %c0_3], %0 {strides = array<i32>} : memref<2x24x24xf32, #tpu.memory_space<vmem>>, vector<2x4x24xf32>,
    %cst_4 = arith.constant 0.000000e+00 : f32
    %3 = vector.broadcast %cst_4 : f32 to vector<2x16x4xf32>
    %c0_5 = arith.constant 0 : index
    %c4 = arith.constant 4 : index
    %c0_6 = arith.constant 0 : index
    %4 = vector.load %arg3[%c0_5, %c4, %c0_6] : memref<2x24x24xf32, #tpu.memory_space<vmem>>, vector<2x16x4xf32>
    tpu.vector_store %arg3[%c0_5, %c4, %c0_6], %3 {strides = array<i32>} : memref<2x24x24xf32, #tpu.memory_space<vmem>>, vector<2x16x4xf32>,
    %c0_7 = arith.constant 0 : index
    %c4_8 = arith.constant 4 : index
    %c20_9 = arith.constant 20 : index
    %5 = vector.load %arg3[%c0_7, %c4_8, %c20_9] : memref<2x24x24xf32, #tpu.memory_space<vmem>>, vector<2x16x4xf32>
    tpu.vector_store %arg3[%c0_7, %c4_8, %c20_9], %3 {strides = array<i32>} : memref<2x24x24xf32, #tpu.memory_space<vmem>>, vector<2x16x4xf32>,
    %c0_10 = arith.constant 0 : index
    %c0_11 = arith.constant 0 : index
    %c0_12 = arith.constant 0 : index
    %6 = vector.load %arg1[%c0_10, %c0_11, %c0_12] : memref<2x16x16xf32, #tpu.memory_space<vmem>>, vector<2x16x16xf32>
    %c0_13 = arith.constant 0 : index
    %c4_14 = arith.constant 4 : index
    %c4_15 = arith.constant 4 : index
    %7 = vector.load %arg3[%c0_13, %c4_14, %c4_15] : memref<2x24x24xf32, #tpu.memory_space<vmem>>, vector<2x16x16xf32>
    tpu.vector_store %arg3[%c0_13, %c4_14, %c4_15], %6 {strides = array<i32>} : memref<2x24x24xf32, #tpu.memory_space<vmem>>, vector<2x16x16xf32>,
    %c0_16 = arith.constant 0 : index
    %c1 = arith.constant 1 : index
    %c2 = arith.constant 2 : index
    %8 = vector.load %arg3[%c0_16, %c1, %c2] : memref<2x24x24xf32, #tpu.memory_space<vmem>>, vector<2x16x16xf32>
    %c0_17 = arith.constant 0 : index
    %c2_18 = arith.constant 2 : index
    %c3 = arith.constant 3 : index
    %9 = vector.load %arg3[%c0_17, %c2_18, %c3] : memref<2x24x24xf32, #tpu.memory_space<vmem>>, vector<2x16x16xf32>
    %10 = arith.addf %8, %9 : vector<2x16x16xf32>
    %c0_19 = arith.constant 0 : index
    %c3_20 = arith.constant 3 : index
    %c3_21 = arith.constant 3 : index
    %11 = vector.load %arg3[%c0_19, %c3_20, %c3_21] : memref<2x24x24xf32, #tpu.memory_space<vmem>>, vector<2x16x16xf32>
    %12 = arith.addf %10, %11 : vector<2x16x16xf32>
    %c0_22 = arith.constant 0 : index
    %c4_23 = arith.constant 4 : index
    %c4_24 = arith.constant 4 : index
    %13 = vector.load %arg3[%c0_22, %c4_23, %c4_24] : memref<2x24x24xf32, #tpu.memory_space<vmem>>, vector<2x16x16xf32>
    %14 = arith.addf %12, %13 : vector<2x16x16xf32>
    %c0_25 = arith.constant 0 : index
    %c5 = arith.constant 5 : index
    %c5_26 = arith.constant 5 : index
    %15 = vector.load %arg3[%c0_25, %c5, %c5_26] : memref<2x24x24xf32, #tpu.memory_space<vmem>>, vector<2x16x16xf32>
    %16 = arith.addf %14, %15 : vector<2x16x16xf32>
    %c0_27 = arith.constant 0 : index
    %c6 = arith.constant 6 : index
    %c5_28 = arith.constant 5 : index
    %17 = vector.load %arg3[%c0_27, %c6, %c5_28] : memref<2x24x24xf32, #tpu.memory_space<vmem>>, vector<2x16x16xf32>
    %18 = arith.addf %16, %17 : vector<2x16x16xf32>
    %c0_29 = arith.constant 0 : index
    %c7 = arith.constant 7 : index
    %c6_30 = arith.constant 6 : index
    %19 = vector.load %arg3[%c0_29, %c7, %c6_30] : memref<2x24x24xf32, #tpu.memory_space<vmem>>, vector<2x16x16xf32>
    %20 = arith.addf %18, %19 : vector<2x16x16xf32>
    %cst_31 = arith.constant 0.142857149 : f32
    %21 = vector.broadcast %cst_31 : f32 to vector<2x16x16xf32>
    %22 = arith.mulf %20, %21 : vector<2x16x16xf32>
    %c0_32 = arith.constant 0 : index
    %c0_33 = arith.constant 0 : index
    %c0_34 = arith.constant 0 : index
    %23 = vector.load %arg2[%c0_32, %c0_33, %c0_34] : memref<2x16x16xf32, #tpu.memory_space<vmem>>, vector<2x16x16xf32>
    tpu.vector_store %arg2[%c0_32, %c0_33, %c0_34], %22 {strides = array<i32>} : memref<2x16x16xf32, #tpu.memory_space<vmem>>, vector<2x16x16xf32>,
    return
  }
  func.func @transform_0(%arg0: i32) -> (i32, i32, i32) {
    %c0_i32 = arith.constant 0 : i32
    %c0_i32_0 = arith.constant 0 : i32
    %c0_i32_1 = arith.constant 0 : i32
    return %arg0, %c0_i32, %c0_i32_0 : i32, i32, i32
  }
  func.func @transform_1(%arg0: i32) -> (i32, i32, i32) {
    %c0_i32 = arith.constant 0 : i32
    %c0_i32_0 = arith.constant 0 : i32
    %c0_i32_1 = arith.constant 0 : i32
    return %arg0, %c0_i32, %c0_i32_0 : i32, i32, i32
  }
}

</mosaic_0001>

<llo_original>
// kernel: tpu_custom_call.1
$region0: #{tpu_custom_call.1}
  #allocation0 [shape = 'u32[]', space=smem, size = 0x4, offset = 0x4, fixed_abs, tag = 'smem constant byte address 0x4 - core index']
  #allocation1 [shape = 'u32[144,128]{1,0:T(1,128)}', space=vmem, size = 0x12000, scoped, tag = 'internal scratch']
  #allocation2 [shape = 'f32[2,24,24]{2,1,0:T(8,128)}', space=vmem, size = 0x6000, scoped, tag = 'scratch operand']
  %s0 = inlined_call_operand.hbm [shape: f32[8,16,16], index: 0, kind: input, shape index: {}]
  %s1 = inlined_call_operand.hbm [shape: f32[8,16,16], index: 1, kind: output, shape index: {}]
  %s2 = sld [smem:[#allocation0]]
  $region41: #{tpu_custom_call.1} parent=0
    _
  %s4 = ssub.s32 1, %s2
  %s5 = scalar_select 0, %s4, %s2
  $region1: #{tpu_custom_call.1} parent=0
    #allocation3 [shape = 'u8[32768]{0}', space=vmem, size = 0x8000, scoped, tag = 'input window, operand 0']
    #allocation4 [shape = 's32[2]{0}', space=sflag, size = 0x8, scoped, tag = 'scoped memory for tpu_custom_call.1']
    #allocation5 [shape = 's32[2]{0}', space=sflag, size = 0x8, scoped, tag = 'scoped memory for tpu_custom_call.1']
    #allocation6 [shape = 'u8[32768]{0}', space=vmem, size = 0x8000, scoped, tag = 'output window, operand 0']
    %6 = vsyncpa [#allocation4], 0
    %s7 = scalar_lea.sflag [#allocation4], 1
    %8 = vsyncpa %s7, 0
    %9 = vsyncpa [#allocation5], 0
    %s10 = scalar_lea.sflag [#allocation5], 1
    %11 = vsyncpa %s10, 0
    loop: start=0, step=1, limit=6
    $region2: #{tpu_custom_call.1} parent=1 // loop_pre_header
      _
    $region3: #{tpu_custom_call.1} parent=1 // loop_header
      %s13 = sphi 0, %s17
      %p14 = scmp.ge.s32.totalorder %s13, 6
      %s23 = sphi 0, %s25
      %s26 = sphi 0, %s23
      %s27 = sphi 0, %s26
      %s43 = sphi 0, %s27
      %s49 = sphi 0, %s51
      %s52 = sphi 0, %s49
      %s53 = sphi 0, %s52
      %s69 = sphi 0, %s53
    $region4: #{tpu_custom_call.1} parent=1 // loop_header_branch
      %16 = sbr.rel (%p14) target = $region8
    $region5: #{tpu_custom_call.1} parent=1 // loop_body
      %s18 = ssub.s32 %s13, 1
      %s19 = ssub.s32 %s13, 2
      %s20 = sadd.s32 %s13, 1
      %s21 = ssub.s32 %s13, %s20
      %p22 = scmp.eq.s32.totalorder %s21, 0
      %s24 = sadd.s32 %s23, 1
      %s25 = scalar_select %p22, %s23, %s24
      %p28 = pneg %p22
      %p29 = scmp.eq.s32.totalorder %s13, 3
      %p30 = por %p28, %p29
      %p31 = scmp.ne.s32.totalorder %s23, %s26
      %p32 = scmp.eq.s32.totalorder %s13, 0
      %p33 = por %p31, %p32
      %p34 = scmp.ne.s32.totalorder %s23, %s26
      %p35 = scmp.eq.s32.totalorder %s18, 3
      %p36 = por %p34, %p35
      %p37 = scmp.ne.s32.totalorder %s26, %s27
      %p38 = scmp.eq.s32.totalorder %s18, 0
      %p39 = por %p37, %p38
      %p40 = scmp.ne.s32.totalorder %s26, %s27
      %p41 = scmp.eq.s32.totalorder %s19, 3
      %p42 = por %p40, %p41
      %p44 = scmp.ne.s32.totalorder %s27, %s43
      %p45 = scmp.eq.s32.totalorder %s19, 0
      %p46 = por %p44, %p45
      %s47 = ssub.s32 %s13, %s20
      %p48 = scmp.eq.s32.totalorder %s47, 0
      %s50 = sadd.s32 %s49, 1
      %s51 = scalar_select %p48, %s49, %s50
      %p54 = pneg %p48
      %p55 = scmp.eq.s32.totalorder %s13, 3
      %p56 = por %p54, %p55
      %p57 = scmp.ne.s32.totalorder %s49, %s52
      %p58 = scmp.eq.s32.totalorder %s13, 0
      %p59 = por %p57, %p58
      %p60 = scmp.ne.s32.totalorder %s49, %s52
      %p61 = scmp.eq.s32.totalorder %s18, 3
      %p62 = por %p60, %p61
      %p63 = scmp.ne.s32.totalorder %s52, %s53
      %p64 = scmp.eq.s32.totalorder %s18, 0
      %p65 = por %p63, %p64
      %p66 = scmp.ne.s32.totalorder %s52, %s53
      %p67 = scmp.eq.s32.totalorder %s19, 3
      %p68 = por %p66, %p67
      %p70 = scmp.ne.s32.totalorder %s53, %s69
      %p71 = scmp.eq.s32.totalorder %s19, 0
      %p72 = por %p70, %p71
      %p73 = scmp.le.s32.totalorder 1, %s13
      %p74 = scmp.lt.s32.totalorder %s13, 5
      %p75 = pnand %p73, %p74
      %p76 = pneg %p75
      // Predicated region
      $region9: #{tpu_custom_call.1} parent=5 // pred_check
        _
      $region10: #{tpu_custom_call.1} parent=5 // pred_check_branch
        %78 = sbr.rel (%p75) target = $region12
      $region11: #{tpu_custom_call.1} parent=5 // pred_region
        %s79 = ssub.s32 %s13, 1
      $region12: #{tpu_custom_call.1} parent=5 // pred_fallthru
        _
      %p80 = scmp.lt.s32.totalorder %s13, 4
      // Predicated region
      $region13: #{tpu_custom_call.1} parent=5 // pred_check
        %p81 = pneg %p80
      $region14: #{tpu_custom_call.1} parent=5 // pred_check_branch
        %83 = sbr.rel (%p81) target = $region16
      $region15: #{tpu_custom_call.1} parent=5 // pred_region
        // Predicated region
        $region17: #{tpu_custom_call.1} parent=15 // pred_check
          %p84 = pneg %p33
        $region18: #{tpu_custom_call.1} parent=15 // pred_check_branch
          %86 = sbr.rel (%p84) target = $region20
        $region19: #{tpu_custom_call.1} parent=15 // pred_region
          %s87 = sand.u32 %s23, 1
          %s88 = scalar_lea.sflag [#allocation4], %s87
          %s89 = sand.u32 %s23, 1
          %s90 = smul.addr %s89, 32
          %s91 = scalar_lea.vmem [#allocation3], %s90
          %s92 = smul.u32 2, %s13
          %s94 = ssub.s32 512, 512
          %95 = vsyncadd %s88, %s94
          %s96 = smul.addr %s92, 2
          %s97 = smul.addr %s96, 128
          %s98 = scalar_lea.hbm %s0, %s97
          %s99 = sshll.u32 %s91, 4
          %s100 = int_to_ptr.vmem [resolvable:$true] %s99
          %105 = dma.hbm_to_vmem [thread:$0]  %s98, 512, %s100, %s88, 128, 128, 8
        $region20: #{tpu_custom_call.1} parent=15 // pred_fallthru
          _
      $region16: #{tpu_custom_call.1} parent=5 // pred_fallthru
        _
      %p106 = scmp.le.s32.totalorder 1, %s13
      %p107 = scmp.lt.s32.totalorder %s13, 5
      %p108 = pnand %p106, %p107
      %p109 = pneg %p108
      // Predicated region
      $region21: #{tpu_custom_call.1} parent=5 // pred_check
        _
      $region22: #{tpu_custom_call.1} parent=5 // pred_check_branch
        %111 = sbr.rel (%p108) target = $region24
      $region23: #{tpu_custom_call.1} parent=5 // pred_region
        %s112 = ssub.s32 %s13, 1
        %s113 = sand.u32 %s26, 1
        %s114 = scalar_lea.sflag [#allocation4], %s113
        %s115 = sand.u32 %s26, 1
        %s116 = smul.addr %s115, 32
        %s117 = scalar_lea.vmem [#allocation3], %s116
        // Predicated region
        $region25: #{tpu_custom_call.1} parent=23 // pred_check
          %p118 = pneg %p39
        $region26: #{tpu_custom_call.1} parent=23 // pred_check_branch
          %120 = sbr.rel (%p118) target = $region28
        $region27: #{tpu_custom_call.1} parent=23 // pred_region
          %121 = dma.done %s114, 512
        $region28: #{tpu_custom_call.1} parent=23 // pred_fallthru
          _
        %s122 = sand.u32 %s26, 1
        %s123 = scalar_lea.sflag [#allocation4], %s122
        %s124 = sand.u32 %s26, 1
        %s125 = smul.addr %s124, 32
        %s126 = scalar_lea.vmem [#allocation3], %s125
        %p127 = pneg %p39
        %p128 = pneg %p36
        %p129 = pneg %p65
        %p130 = pneg %p62
        %s131 = sand.u32 %s52, 1
        %s132 = scalar_lea.sflag [#allocation5], %s131
        %s133 = sand.u32 %s52, 1
        %s134 = smul.addr %s133, 32
        %s135 = scalar_lea.vmem [#allocation6], %s134
        %s136 = smul.u32 2, %s18
        %s137 = smul.u32 2, %s18
        %vm138 = vcmask 191488
        %139 = vst.msk [vmem:[#allocation2] sm:$0xf] %vm138, 0.0
        %140 = vst.msk [vmem:[#allocation2 + $0x18] sm:$0xf] %vm138, 0.0
        %141 = vst.msk [vmem:[#allocation2 + $0x14] sm:$0xf] %vm138, 0.0
        %142 = vst.msk [vmem:[#allocation2 + $0x2c] sm:$0xf] %vm138, 0.0
        %vm143 = vcmask 31744
        %144 = vst.msk [vmem:[#allocation2 + $0x4] sm:$0xff] %vm143, 0.0
        %145 = vst.msk [vmem:[#allocation2 + $0xc] sm:$0xff] %vm143, 0.0
        %146 = vst.msk [vmem:[#allocation2 + $0x1c] sm:$0xff] %vm143, 0.0
        %147 = vst.msk [vmem:[#allocation2 + $0x24] sm:$0xff] %vm143, 0.0
        %vm148 = vcmask 195744
        %149 = vst.msk [vmem:[#allocation2 + $0x4] sm:$0xff] %vm148, 0.0
        %150 = vst.msk [vmem:[#allocation2 + $0xc] sm:$0xff] %vm148, 0.0
        %151 = vst.msk [vmem:[#allocation2 + $0x1c] sm:$0xff] %vm148, 0.0
        %152 = vst.msk [vmem:[#allocation2 + $0x24] sm:$0xff] %vm148, 0.0
        %v153 = vld [vmem:[%s117] sm:$0xff]
        %v154 = vld [vmem:[%s117 + $0x8] sm:$0xff]
        %v155 = vld [vmem:[%s117 + $0x10] sm:$0xff]
        %v156 = vld [vmem:[%s117 + $0x18] sm:$0xff]
        %161 = vrot.lane.b32.xlu0 %v153, 4
        %v162 = vpop.permute.xlu0 %161
        %163 = vrot.lane.b32.xlu0 %v154, 4
        %v164 = vpop.permute.xlu0 %163
        %165 = vrot.lane.b32.xlu0 %v155, 4
        %v166 = vpop.permute.xlu0 %165
        %167 = vrot.lane.b32.xlu0 %v156, 4
        %v168 = vpop.permute.xlu0 %167
        %vm173 = vcmask 162848
        %174 = vst.msk [vmem:[#allocation2 + $0x4] sm:$0xff] %vm173, %v162
        %175 = vst.msk [vmem:[#allocation2 + $0xc] sm:$0xff] %vm173, %v164
        %176 = vst.msk [vmem:[#allocation2 + $0x1c] sm:$0xff] %vm173, %v166
        %177 = vst.msk [vmem:[#allocation2 + $0x24] sm:$0xff] %vm173, %v168
        %v178 = vld [vmem:[#allocation2 + $0x1] sm:$0xff]
        %v179 = vld [vmem:[#allocation2 + $0x9] sm:$0xff]
        %v180 = vld [vmem:[#allocation2 + $0x19] sm:$0xff]
        %v181 = vld [vmem:[#allocation2 + $0x21] sm:$0xff]
        %v182 = vld [vmem:[#allocation2 + $0x2] sm:$0xff]
        %v183 = vld [vmem:[#allocation2 + $0xa] sm:$0xff]
        %v184 = vld [vmem:[#allocation2 + $0x1a] sm:$0xff]
        %v185 = vld [vmem:[#allocation2 + $0x22] sm:$0xff]
        %190 = vrot.lane.b32.xlu0 %v182, 127
        %v191 = vpop.permute.xlu0 %190
        %192 = vrot.lane.b32.xlu0 %v183, 127
        %v193 = vpop.permute.xlu0 %192
        %194 = vrot.lane.b32.xlu0 %v184, 127
        %v195 = vpop.permute.xlu0 %194
        %196 = vrot.lane.b32.xlu0 %v185, 127
        %v197 = vpop.permute.xlu0 %196
        %v202 = vadd.f32 %v178, %v191
        %v203 = vadd.f32 %v179, %v193
        %v204 = vadd.f32 %v180, %v195
        %v205 = vadd.f32 %v181, %v197
        %v206 = vld [vmem:[#allocation2 + $0x3] sm:$0xff]
        %v207 = vld [vmem:[#allocation2 + $0xb] sm:$0xff]
        %v208 = vld [vmem:[#allocation2 + $0x1b] sm:$0xff]
        %v209 = vld [vmem:[#allocation2 + $0x23] sm:$0xff]
        %214 = vrot.lane.b32.xlu0 %v206, 127
        %v215 = vpop.permute.xlu0 %214
        %216 = vrot.lane.b32.xlu0 %v207, 127
        %v217 = vpop.permute.xlu0 %216
        %218 = vrot.lane.b32.xlu0 %v208, 127
        %v219 = vpop.permute.xlu0 %218
        %220 = vrot.lane.b32.xlu0 %v209, 127
        %v221 = vpop.permute.xlu0 %220
        %v226 = vadd.f32 %v202, %v215
        %v227 = vadd.f32 %v203, %v217
        %v228 = vadd.f32 %v204, %v219
        %v229 = vadd.f32 %v205, %v221
        %v230 = vld [vmem:[#allocation2 + $0x4] sm:$0xff]
        %v231 = vld [vmem:[#allocation2 + $0xc] sm:$0xff]
        %v232 = vld [vmem:[#allocation2 + $0x1c] sm:$0xff]
        %v233 = vld [vmem:[#allocation2 + $0x24] sm:$0xff]
        %238 = vrot.lane.b32.xlu0 %v230, 126
        %v239 = vpop.permute.xlu0 %238
        %240 = vrot.lane.b32.xlu0 %v231, 126
        %v241 = vpop.permute.xlu0 %240
        %242 = vrot.lane.b32.xlu0 %v232, 126
        %v243 = vpop.permute.xlu0 %242
        %244 = vrot.lane.b32.xlu0 %v233, 126
        %v245 = vpop.permute.xlu0 %244
        %v250 = vadd.f32 %v226, %v239
        %v251 = vadd.f32 %v227, %v241
        %v252 = vadd.f32 %v228, %v243
        %v253 = vadd.f32 %v229, %v245
        %v254 = vld [vmem:[#allocation2 + $0x5] sm:$0xff]
        %v255 = vld [vmem:[#allocation2 + $0xd] sm:$0xff]
        %v256 = vld [vmem:[#allocation2 + $0x1d] sm:$0xff]
        %v257 = vld [vmem:[#allocation2 + $0x25] sm:$0xff]
        %262 = vrot.lane.b32.xlu0 %v254, 125
        %v263 = vpop.permute.xlu0 %262
        %264 = vrot.lane.b32.xlu0 %v255, 125
        %v265 = vpop.permute.xlu0 %264
        %266 = vrot.lane.b32.xlu0 %v256, 125
        %v267 = vpop.permute.xlu0 %266
        %268 = vrot.lane.b32.xlu0 %v257, 125
        %v269 = vpop.permute.xlu0 %268
        %v274 = vadd.f32 %v250, %v263
        %v275 = vadd.f32 %v251, %v265
        %v276 = vadd.f32 %v252, %v267
        %v277 = vadd.f32 %v253, %v269
        %v278 = vld [vmem:[#allocation2 + $0x6] sm:$0xff]
        %v279 = vld [vmem:[#allocation2 + $0xe] sm:$0xff]
        %v280 = vld [vmem:[#allocation2 + $0x1e] sm:$0xff]
        %v281 = vld [vmem:[#allocation2 + $0x26] sm:$0xff]
        %286 = vrot.lane.b32.xlu0 %v278, 125
        %v287 = vpop.permute.xlu0 %286
        %288 = vrot.lane.b32.xlu0 %v279, 125
        %v289 = vpop.permute.xlu0 %288
        %290 = vrot.lane.b32.xlu0 %v280, 125
        %v291 = vpop.permute.xlu0 %290
        %292 = vrot.lane.b32.xlu0 %v281, 125
        %v293 = vpop.permute.xlu0 %292
        %v298 = vadd.f32 %v274, %v287
        %v299 = vadd.f32 %v275, %v289
        %v300 = vadd.f32 %v276, %v291
        %v301 = vadd.f32 %v277, %v293
        %v302 = vld [vmem:[#allocation2 + $0x7] sm:$0xff]
        %v303 = vld [vmem:[#allocation2 + $0xf] sm:$0xff]
        %v304 = vld [vmem:[#allocation2 + $0x1f] sm:$0xff]
        %v305 = vld [vmem:[#allocation2 + $0x27] sm:$0xff]
        %310 = vrot.lane.b32.xlu0 %v302, 124
        %v311 = vpop.permute.xlu0 %310
        %312 = vrot.lane.b32.xlu0 %v303, 124
        %v313 = vpop.permute.xlu0 %312
        %314 = vrot.lane.b32.xlu0 %v304, 124
        %v315 = vpop.permute.xlu0 %314
        %316 = vrot.lane.b32.xlu0 %v305, 124
        %v317 = vpop.permute.xlu0 %316
        %v322 = vadd.f32 %v298, %v311
        %v323 = vadd.f32 %v299, %v313
        %v324 = vadd.f32 %v300, %v315
        %v325 = vadd.f32 %v301, %v317
        %v326 = vmul.f32 %v322, 0.14285715
        %v327 = vmul.f32 %v323, 0.14285715
        %v328 = vmul.f32 %v324, 0.14285715
        %v329 = vmul.f32 %v325, 0.14285715
        %334 = vrot.lane.b32.xlu0 %v326, 126
        %v335 = vpop.permute.xlu0 %334
        %336 = vrot.lane.b32.xlu0 %v327, 126
        %v337 = vpop.permute.xlu0 %336
        %338 = vrot.lane.b32.xlu0 %v328, 126
        %v339 = vpop.permute.xlu0 %338
        %340 = vrot.lane.b32.xlu0 %v329, 126
        %v341 = vpop.permute.xlu0 %340
        %vm346 = vcmask 130048
        %347 = vst.msk [vmem:[%s135] sm:$0xff] %vm346, %v335
        %348 = vst.msk [vmem:[%s135 + $0x8] sm:$0xff] %vm346, %v337
        %349 = vst.msk [vmem:[%s135 + $0x10] sm:$0xff] %vm346, %v339
        %350 = vst.msk [vmem:[%s135 + $0x18] sm:$0xff] %vm346, %v341
        %s351 = sand.u32 %s52, 1
        %s352 = scalar_lea.sflag [#allocation5], %s351
        %s353 = sand.u32 %s52, 1
        %s354 = smul.addr %s353, 32
        %s355 = scalar_lea.vmem [#allocation6], %s354
        // Predicated region
        $region29: #{tpu_custom_call.1} parent=23 // pred_check
          %p356 = pneg %p62
        $region30: #{tpu_custom_call.1} parent=23 // pred_check_branch
          %358 = sbr.rel (%p356) target = $region32
        $region31: #{tpu_custom_call.1} parent=23 // pred_region
          %s359 = smul.u32 2, %s18
          %s361 = ssub.s32 512, 512
          %362 = vsyncadd %s352, %s361
          %s363 = smul.addr %s359, 2
          %s364 = smul.addr %s363, 128
          %s365 = scalar_lea.hbm %s1, %s364
          %s366 = sshll.u32 %s355, 4
          %s367 = int_to_ptr.vmem [resolvable:$true] %s366
          %372 = dma.vmem_to_hbm [thread:$0]  %s367, 512, %s365, %s352, 128, 128, 8
        $region32: #{tpu_custom_call.1} parent=23 // pred_fallthru
          _
      $region24: #{tpu_custom_call.1} parent=5 // pred_fallthru
        _
      %p373 = scmp.le.s32.totalorder 2, %s13
      // Predicated region
      $region33: #{tpu_custom_call.1} parent=5 // pred_check
        %p374 = pneg %p373
      $region34: #{tpu_custom_call.1} parent=5 // pred_check_branch
        %376 = sbr.rel (%p374) target = $region36
      $region35: #{tpu_custom_call.1} parent=5 // pred_region
        %s377 = ssub.s32 %s13, 2
        // Predicated region
        $region37: #{tpu_custom_call.1} parent=35 // pred_check
          %p378 = pneg %p68
        $region38: #{tpu_custom_call.1} parent=35 // pred_check_branch
          %380 = sbr.rel (%p378) target = $region40
        $region39: #{tpu_custom_call.1} parent=35 // pred_region
          %s381 = sand.u32 %s53, 1
          %s382 = scalar_lea.sflag [#allocation5], %s381
          %s383 = sand.u32 %s53, 1
          %s384 = smul.addr %s383, 32
          %s385 = scalar_lea.vmem [#allocation6], %s384
          %386 = dma.done %s382, 512
        $region40: #{tpu_custom_call.1} parent=35 // pred_fallthru
          _
      $region36: #{tpu_custom_call.1} parent=5 // pred_fallthru
        _
    $region6: #{tpu_custom_call.1} parent=1 // loop_footer
      %s17 = sadd.s32 1, %s13
    $region7: #{tpu_custom_call.1} parent=1 // loop_footer_branch
      %12 = sbr.rel target = $region3
    $region8: #{tpu_custom_call.1} parent=1 // loop_exit
      _
    %387 = vsyncpa [#allocation4], 1
    %s388 = scalar_lea.sflag [#allocation4], 1
    %389 = vsyncpa %s388, 1
    %390 = vsyncpa [#allocation5], 1
    %s391 = scalar_lea.sflag [#allocation5], 1
    %392 = vsyncpa %s391, 1

</llo_original>
